<compile_context>
chip_gen: v5e
topology: v5e:2x2
jax: 0.10.0
libtpu: 0.0.40
codegen_flags: <defaults>
</compile_context>

<pallas_src>
import jax
import jax.numpy as jnp
from jax.experimental import pallas as pl
from jax.experimental.pallas import tpu as pltpu

EPS = 1e-5


def _round_up(x, m):
    return ((x + m - 1) // m) * m


def _vmem_capacity_bytes():
    """Best-effort physical VMEM size; conservative (v7x) fallback."""
    try:
        info = pltpu.get_tpu_info()
        for attr in ("vmem_capacity_bytes", "vmem_bytes", "vmem_capacity"):
            v = getattr(info, attr, None)
            if v:
                return int(v)
    except Exception:
        pass
    return 64 * 1024 * 1024


def _pick_tile(n8, pref):
    """Largest multiple-of-8 divisor of n8 that is <= pref.

    n8 is the batch rounded up to a multiple of 8.  When n8 >= 16 the tile is
    capped at n8//2 so there are >=2 grid steps (megacore gets work on v7x).
    Using a divisor avoids padding x to a tile multiple (no extra HBM copy).
    """
    cap = min(pref, n8)
    if n8 >= 16:
        cap = min(cap, (n8 // 2) // 8 * 8)
    cap = max(cap, 8)
    for tn in range(cap, 7, -8):
        if n8 % tn == 0:
            return tn, n8 // tn
    return 8, n8 // 8


# --------------------------------------------------------------------------
# Pass 1: linear1 (no bias) + single-pass partial BN statistics per N-tile.
# --------------------------------------------------------------------------
def linear1_stats_kernel(x_ref, w1t_ref, h_ref, sum_ref, sumsq_ref):
    # x_ref: (TN, D), w1t_ref: (D, H) pre-transposed -> canonical MXU matmul.
    h = jnp.dot(x_ref[...], w1t_ref[...],
                preferred_element_type=jnp.float32)          # (TN, H) f32

    h_ref[...] = h.astype(h_ref.dtype)                        # bf16 intermediate
    s = jnp.sum(h, axis=0, keepdims=True)                     # (1, H)
    ss = jnp.sum(h * h, axis=0, keepdims=True)                # (1, H)
    # Lane-dense (8, H) blocks; row 0 carries the value (rows replicated),
    # the finalize reads row 0 of each tile.
    sum_ref[...] = jnp.broadcast_to(s, sum_ref.shape)
    sumsq_ref[...] = jnp.broadcast_to(ss, sumsq_ref.shape)


# --------------------------------------------------------------------------
# Pass 2: fused BN affine (one FMA) + ReLU + linear2 (+ bias).
# --------------------------------------------------------------------------
def bn_relu_linear2_kernel(h_ref, scale_ref, shift_ref, w2t_ref, b2_ref, o_ref):
    h = h_ref[...].astype(jnp.float32)                        # (TN, H)
    hn = jnp.maximum(h * scale_ref[...] + shift_ref[...], 0.0)

    out = jnp.dot(hn.astype(w2t_ref.dtype), w2t_ref[...],
                  preferred_element_type=jnp.float32)          # (TN, O)
    o_ref[...] = (out + b2_ref[...].astype(jnp.float32)).astype(o_ref.dtype)


def byol_projection_head(x, w1, gamma, beta, w2, b2):
    """x: (N, D); w1: (H, D) PyTorch layout; w2: (O, H) PyTorch layout."""
    n, d = x.shape
    h_dim = w1.shape[0]
    o_dim = w2.shape[0]
    f32 = jnp.float32

    # Lane-dense padding of the feature dims (no-op for real BYOL 2048/4096/256).
    d_p = _round_up(d, 128)
    h_p = _round_up(h_dim, 128)
    o_p = _round_up(o_dim, 128)

    # Generation-aware VMEM budget and tile preferences.
    vmem_cap = _vmem_capacity_bytes()
    big_vmem = vmem_cap >= 96 * 1024 * 1024          # v5e / v6e (128 MiB)
    vmem_limit = int(min(vmem_cap - 16 * 1024 * 1024, 112 * 1024 * 1024))
    tn1_pref = 512 if big_vmem else 256              # pass 1 (MXU-bound)
    tn2_pref = 1024                                  # pass 2 (HBM-bound, small weights)

    # Batch only padded to a multiple of 8 (sublane); tiles divide n8 exactly.
    n8 = _round_up(n, 8)
    tn1, nt1 = _pick_tile(n8, tn1_pref)
    tn2, nt2 = _pick_tile(n8, tn2_pref)

    # Pad / pre-transpose weights once in the wrapper (fuses with the pad copy).
    # Zero padding keeps the math exact: padded rows/cols contribute 0 to the
    # matmuls and to sum / sum-of-squares; mean/var divide by the true N.
    x_p = x if (n == n8 and d == d_p) else jnp.pad(x, ((0, n8 - n), (0, d_p - d)))
    w1t = jnp.pad(w1, ((0, h_p - h_dim), (0, d_p - d))).T       # (d_p, h_p)
    w2t = jnp.pad(w2, ((0, o_p - o_dim), (0, h_p - h_dim))).T   # (h_p, o_p)
    gamma_p = jnp.pad(gamma.astype(f32), (0, h_p - h_dim)).reshape(1, h_p)
    beta_p = jnp.pad(beta.astype(f32), (0, h_p - h_dim)).reshape(1, h_p)
    b2_p = jnp.pad(b2, (0, o_p - o_dim)).reshape(1, o_p)

    h_dtype = jnp.bfloat16   # bf16 intermediate: halves pass-2 HBM traffic.

    cparams = pltpu.CompilerParams(
        dimension_semantics=("parallel",),           # shard N-tiles across TCs
        vmem_limit_bytes=vmem_limit,
    )

    itemsize = lambda a: jnp.dtype(a.dtype).itemsize

    # ---- Pass 1: h = x @ w1^T, per-tile partial BN statistics -------------
    cost1 = pl.CostEstimate(
        flops=2 * n8 * d_p * h_p + 3 * n8 * h_p,
        transcendentals=0,
        bytes_accessed=(n8 * d_p * itemsize(x_p) + d_p * h_p * itemsize(w1t)
                        + n8 * h_p * 2 + 2 * nt1 * 8 * h_p * 4),
    )
    h_out, sums, sumsqs = pl.pallas_call(
        linear1_stats_kernel,
        out_shape=(
            jax.ShapeDtypeStruct((n8, h_p), h_dtype),
            jax.ShapeDtypeStruct((nt1 * 8, h_p), f32),
            jax.ShapeDtypeStruct((nt1 * 8, h_p), f32),
        ),
        grid=(nt1,),
        in_specs=[
            pl.BlockSpec((tn1, d_p), lambda i: (i, 0)),                 # x tile (pipelined)
            pl.BlockSpec((d_p, h_p), lambda i: (0, 0),
                         pipeline_mode=pl.Buffered(1)),                 # w1^T resident, 1 buffer
        ],
        out_specs=(
            pl.BlockSpec((tn1, h_p), lambda i: (i, 0)),
            pl.BlockSpec((8, h_p), lambda i: (i, 0)),
            pl.BlockSpec((8, h_p), lambda i: (i, 0)),
        ),
        compiler_params=cparams,
        cost_estimate=cost1,
    )(x_p, w1t)

    # ---- Tiny XLA finalize: global BN stats folded into scale/shift --------
    inv_n = f32(1.0 / n)
    total_sum = sums.reshape(nt1, 8, h_p)[:, 0, :].sum(axis=0, keepdims=True)
    total_sq = sumsqs.reshape(nt1, 8, h_p)[:, 0, :].sum(axis=0, keepdims=True)
    mean = total_sum * inv_n
    var = jnp.maximum(total_sq * inv_n - mean * mean, 0.0)     # biased variance
    scale = gamma_p * jax.lax.rsqrt(var + EPS)
    shift = beta_p - mean * scale

    # ---- Pass 2: BN-FMA + ReLU + linear2 + bias -----------------------------
    cost2 = pl.CostEstimate(
        flops=2 * n8 * h_p * o_p + 4 * n8 * h_p,
        transcendentals=0,
        bytes_accessed=(n8 * h_p * 2 + h_p * o_p * itemsize(w2t)
                        + n8 * o_p * jnp.dtype(x.dtype).itemsize + 2 * h_p * 4 + o_p * 4),
    )
    out_p = pl.pallas_call(
        bn_relu_linear2_kernel,
        out_shape=jax.ShapeDtypeStruct((n8, o_p), x.dtype),
        grid=(nt2,),
        in_specs=[
            pl.BlockSpec((tn2, h_p), lambda i: (i, 0)),                 # h tile (pipelined)
            pl.BlockSpec((1, h_p), lambda i: (0, 0),
                         pipeline_mode=pl.Buffered(1)),                 # scale resident
            pl.BlockSpec((1, h_p), lambda i: (0, 0),
                         pipeline_mode=pl.Buffered(1)),                 # shift resident
            pl.BlockSpec((h_p, o_p), lambda i: (0, 0),
                         pipeline_mode=pl.Buffered(1)),                 # w2^T resident
            pl.BlockSpec((1, o_p), lambda i: (0, 0),
                         pipeline_mode=pl.Buffered(1)),                 # b2 resident
        ],
        out_specs=pl.BlockSpec((tn2, o_p), lambda i: (i, 0)),
        compiler_params=cparams,
        cost_estimate=cost2,
    )(h_out, scale, shift, w2t, b2_p)

    return out_p[:n, :o_dim]


def reference(x, w1, gamma, beta, w2, b2):
    h = x.astype(jnp.float32) @ w1.T.astype(jnp.float32)
    mean = h.mean(0, keepdims=True)
    var = ((h - mean) ** 2).mean(0, keepdims=True)
    hn = (h - mean) / jnp.sqrt(var + EPS) * gamma + beta
    hn = jnp.maximum(hn, 0.0)
    return hn @ w2.T.astype(jnp.float32) + b2


if __name__ == "__main__":
    # Small shapes consistent with the module: batch=8, input_dim=32,
    # hidden_dim=64, output_dim=16 (real BYOL: 2048 / 4096 / 256).
    N, D, H, O = 8, 32, 64, 16

    key = jax.random.PRNGKey(0)
    kx, kw1, kw2, kb2 = jax.random.split(key, 4)

    x = jax.random.normal(kx, (N, D), dtype=jnp.float32)

    # PyTorch-like uniform init for linears, gamma=1 / beta=0 for BatchNorm1d.
    bound1 = 1.0 / (D ** 0.5)
    w1 = jax.random.uniform(kw1, (H, D), jnp.float32, -bound1, bound1)
    gamma = jnp.ones((H,), jnp.float32)
    beta = jnp.zeros((H,), jnp.float32)
    bound2 = 1.0 / (H ** 0.5)
    w2 = jax.random.uniform(kw2, (O, H), jnp.float32, -bound2, bound2)
    b2 = jax.random.uniform(kb2, (O,), jnp.float32, -bound2, bound2)

    out = jax.block_until_ready(byol_projection_head(x, w1, gamma, beta, w2, b2))
    ref = reference(x, w1, gamma, beta, w2, b2)

    assert out.shape == (N, O)
    # h is stored as bf16 (perf), so compare against the f32 reference with a
    # correspondingly relaxed tolerance.
    err = float(jnp.max(jnp.abs(out.astype(jnp.float32) - ref)))
    assert jnp.allclose(out.astype(jnp.float32), ref, atol=2e-2, rtol=2e-2), err

    print("KERNEL_OK")
</pallas_src>

<mosaic_0001>
module attributes {stable_mosaic.version = 11 : i64} {
  func.func @linear1_stats_kernel(%arg0: i32, %arg1: memref<8x128xf32, #tpu.memory_space<vmem>>, %arg2: memref<128x128xf32, #tpu.memory_space<vmem>>, %arg3: memref<8x128xbf16, #tpu.memory_space<vmem>>, %arg4: memref<8x128xf32, #tpu.memory_space<vmem>>, %arg5: memref<8x128xf32, #tpu.memory_space<vmem>>) attributes {dimension_semantics = [#tpu.dimension_semantics<parallel>], iteration_bounds = array<i64: 1>, scalar_prefetch = 0 : i64, scratch_operands = 0 : i64, tpu.core_type = #tpu.core_type<tc>, window_params = [{transform_indices = @transform_0, window_bounds = array<i64: 8, 128>}, {pipeline_mode = #tpu.pipeline_mode<synchronous>, transform_indices = @transform_1, window_bounds = array<i64: 128, 128>}, {transform_indices = @transform_2, window_bounds = array<i64: 8, 128>}, {transform_indices = @transform_3, window_bounds = array<i64: 8, 128>}, {transform_indices = @transform_4, window_bounds = array<i64: 8, 128>}]} {
    %c0 = arith.constant 0 : index
    %c0_0 = arith.constant 0 : index
    %0 = vector.load %arg1[%c0, %c0_0] : memref<8x128xf32, #tpu.memory_space<vmem>>, vector<8x128xf32>
    %c0_1 = arith.constant 0 : index
    %c0_2 = arith.constant 0 : index
    %1 = vector.load %arg2[%c0_1, %c0_2] : memref<128x128xf32, #tpu.memory_space<vmem>>, vector<128x128xf32>
    %cst = arith.constant dense<0.000000e+00> : vector<8x128xf32>
    %2 = tpu.matmul %0, %1, %cst {dimension_numbers = #tpu.dot_dimension_numbers<[1], [0], [0], [1], [0, 0, 1, 1], [], []>} : vector<8x128xf32>, vector<128x128xf32>, vector<8x128xf32> -> vector<8x128xf32>
    %3 = arith.truncf %2 : vector<8x128xf32> to vector<8x128xbf16>
    %c0_3 = arith.constant 0 : index
    %c0_4 = arith.constant 0 : index
    %4 = vector.load %arg3[%c0_3, %c0_4] : memref<8x128xbf16, #tpu.memory_space<vmem>>, vector<8x128xbf16>
    tpu.vector_store %arg3[%c0_3, %c0_4], %3 {strides = array<i32>} : memref<8x128xbf16, #tpu.memory_space<vmem>>, vector<8x128xbf16>,
    %cst_5 = arith.constant dense<0.000000e+00> : vector<128xf32>
    %5 = vector.multi_reduction <add>, %2, %cst_5 [0] : vector<8x128xf32> to vector<128xf32>
    %6 = vector.shape_cast %5 : vector<128xf32> to vector<1x128xf32>
    %7 = arith.mulf %2, %2 : vector<8x128xf32>
    %cst_6 = arith.constant dense<0.000000e+00> : vector<128xf32>
    %8 = vector.multi_reduction <add>, %7, %cst_6 [0] : vector<8x128xf32> to vector<128xf32>
    %9 = vector.shape_cast %8 : vector<128xf32> to vector<1x128xf32>
    %10 = vector.shape_cast %6 : vector<1x128xf32> to vector<1x128xf32>
    %11 = vector.broadcast %10 : vector<1x128xf32> to vector<8x128xf32>
    %c0_7 = arith.constant 0 : index
    %c0_8 = arith.constant 0 : index
    %12 = vector.load %arg4[%c0_7, %c0_8] : memref<8x128xf32, #tpu.memory_space<vmem>>, vector<8x128xf32>
    tpu.vector_store %arg4[%c0_7, %c0_8], %11 {strides = array<i32>} : memref<8x128xf32, #tpu.memory_space<vmem>>, vector<8x128xf32>,
    %13 = vector.shape_cast %9 : vector<1x128xf32> to vector<1x128xf32>
    %14 = vector.broadcast %13 : vector<1x128xf32> to vector<8x128xf32>
    %c0_9 = arith.constant 0 : index
    %c0_10 = arith.constant 0 : index
    %15 = vector.load %arg5[%c0_9, %c0_10] : memref<8x128xf32, #tpu.memory_space<vmem>>, vector<8x128xf32>
    tpu.vector_store %arg5[%c0_9, %c0_10], %14 {strides = array<i32>} : memref<8x128xf32, #tpu.memory_space<vmem>>, vector<8x128xf32>,
    return
  }
  func.func @transform_0(%arg0: i32) -> (i32, i32) {
    %c0_i32 = arith.constant 0 : i32
    %c0_i32_0 = arith.constant 0 : i32
    return %arg0, %c0_i32 : i32, i32
  }
  func.func @transform_1(%arg0: i32) -> (i32, i32) {
    %c0_i32 = arith.constant 0 : i32
    %c0_i32_0 = arith.constant 0 : i32
    %c0_i32_1 = arith.constant 0 : i32
    return %c0_i32, %c0_i32_0 : i32, i32
  }
  func.func @transform_2(%arg0: i32) -> (i32, i32) {
    %c0_i32 = arith.constant 0 : i32
    %c0_i32_0 = arith.constant 0 : i32
    return %arg0, %c0_i32 : i32, i32
  }
  func.func @transform_3(%arg0: i32) -> (i32, i32) {
    %c0_i32 = arith.constant 0 : i32
    %c0_i32_0 = arith.constant 0 : i32
    return %arg0, %c0_i32 : i32, i32
  }
  func.func @transform_4(%arg0: i32) -> (i32, i32) {
    %c0_i32 = arith.constant 0 : i32
    %c0_i32_0 = arith.constant 0 : i32
    return %arg0, %c0_i32 : i32, i32
  }
}

</mosaic_0001>

<llo_original>
// kernel: tpu_custom_call.1
$region0: #{tpu_custom_call.1}
  #allocation0 [shape = 'u32[]', space=smem, size = 0x4, offset = 0x4, fixed_abs, tag = 'smem constant byte address 0x4 - core index']
  #allocation1 [shape = 'u32[72,128]{1,0:T(1,128)}', space=vmem, size = 0x9000, scoped, tag = 'internal scratch']
  %s0 = inlined_call_operand.hbm [shape: f32[8,128], index: 0, kind: input, shape index: {}]
  %s1 = inlined_call_operand.hbm [shape: f32[128,128], index: 1, kind: input, shape index: {}]
  %s2 = inlined_call_operand.hbm [shape: bf16[8,128], index: 2, kind: output, shape index: {0}]
  %s3 = inlined_call_operand.hbm [shape: f32[8,128], index: 3, kind: output, shape index: {1}]
  %s4 = inlined_call_operand.hbm [shape: f32[8,128], index: 4, kind: output, shape index: {2}]
  %5 = xla_tuple %s2, %s3, %s4
  %s6 = sld [smem:[#allocation0]]
  $region42: #{tpu_custom_call.1} parent=0
    _
  %s8 = ssub.s32 1, %s6
  %s9 = scalar_select 0, %s8, %s6
  $region1: #{tpu_custom_call.1} parent=0
    #allocation2 [shape = 'u8[4096]{0}', space=vmem, size = 0x1000, scoped, tag = 'input window, operand 0, single buffered']
    #allocation3 [shape = 's32[1]{0}', space=sflag, size = 0x4, scoped, tag = 'scoped memory for tpu_custom_call.1']
    #allocation4 [shape = 's32[1]{0}', space=sflag, size = 0x4, scoped, tag = 'scoped memory for tpu_custom_call.1']
    #allocation5 [shape = 'u8[65536]{0}', space=vmem, size = 0x10000, scoped, tag = 'input window, operand 1, single buffered']
    #allocation6 [shape = 's32[1]{0}', space=sflag, size = 0x4, scoped, tag = 'scoped memory for tpu_custom_call.1']
    #allocation7 [shape = 'u8[2048]{0}', space=vmem, size = 0x800, scoped, tag = 'output window, operand 0, single buffered']
    #allocation8 [shape = 'u8[4096]{0}', space=vmem, size = 0x1000, scoped, tag = 'output window, operand 1, single buffered']
    #allocation9 [shape = 's32[1]{0}', space=sflag, size = 0x4, scoped, tag = 'scoped memory for tpu_custom_call.1']
    #allocation10 [shape = 'u8[4096]{0}', space=vmem, size = 0x1000, scoped, tag = 'output window, operand 2, single buffered']
    %10 = vsyncpa [#allocation3], 0
    %11 = vsyncpa [#allocation6], 0
    %12 = vsyncpa [#allocation4], 0
    %13 = vsyncpa [#allocation9], 0
    // Predicated region
    $region2: #{tpu_custom_call.1} parent=1 // pred_check
      _
    $region3: #{tpu_custom_call.1} parent=1 // pred_check_branch
      %15 = sbr.rel (0) target = $region5
    $region4: #{tpu_custom_call.1} parent=1 // pred_region
      %17 = vsyncadd [#allocation3], 0
      %s19 = sshll.u32 %s0, 4
      %s20 = int_to_ptr.hbm [resolvable:$true] %s19
      %s21 = sshll.u32 [#allocation2], 4
      %s22 = int_to_ptr.vmem [resolvable:$true] %s21
      %24 = dma.hbm_to_vmem [thread:$0]  %s20, 128, %s22, [#allocation3]
    $region5: #{tpu_custom_call.1} parent=1 // pred_fallthru
      _
    // Predicated region
    $region6: #{tpu_custom_call.1} parent=1 // pred_check
      _
    $region7: #{tpu_custom_call.1} parent=1 // pred_check_branch
      %26 = sbr.rel (0) target = $region9
    $region8: #{tpu_custom_call.1} parent=1 // pred_region
      %28 = vsyncadd [#allocation6], 0
      %s29 = sshll.u32 %s1, 4
      %s30 = int_to_ptr.hbm [resolvable:$true] %s29
      %s31 = sshll.u32 [#allocation5], 4
      %s32 = int_to_ptr.vmem [resolvable:$true] %s31
      %37 = dma.hbm_to_vmem [thread:$0]  %s30, 2048, %s32, [#allocation6], 128, 128, 8
    $region9: #{tpu_custom_call.1} parent=1 // pred_fallthru
      _
    // Predicated region
    $region10: #{tpu_custom_call.1} parent=1 // pred_check
      _
    $region11: #{tpu_custom_call.1} parent=1 // pred_check_branch
      %39 = sbr.rel (0) target = $region13
    $region12: #{tpu_custom_call.1} parent=1 // pred_region
      %41 = dma.done [#allocation3], 128
    $region13: #{tpu_custom_call.1} parent=1 // pred_fallthru
      _
    // Predicated region
    $region14: #{tpu_custom_call.1} parent=1 // pred_check
      _
    $region15: #{tpu_custom_call.1} parent=1 // pred_check_branch
      %43 = sbr.rel (0) target = $region17
    $region16: #{tpu_custom_call.1} parent=1 // pred_region
      %45 = dma.done [#allocation6], 2048
    $region17: #{tpu_custom_call.1} parent=1 // pred_fallthru
      _
    %v46 = vld [vmem:[#allocation2] sm:$0xff]
    %v47 = vld [vmem:[#allocation5] sm:$0xff]
    %v48 = vld [vmem:[#allocation5 + $0x8] sm:$0xff]
    %v49 = vld [vmem:[#allocation5 + $0x10] sm:$0xff]
    %v50 = vld [vmem:[#allocation5 + $0x18] sm:$0xff]
    %v51 = vld [vmem:[#allocation5 + $0x20] sm:$0xff]
    %v52 = vld [vmem:[#allocation5 + $0x28] sm:$0xff]
    %v53 = vld [vmem:[#allocation5 + $0x30] sm:$0xff]
    %v54 = vld [vmem:[#allocation5 + $0x38] sm:$0xff]
    %v55 = vld [vmem:[#allocation5 + $0x40] sm:$0xff]
    %v56 = vld [vmem:[#allocation5 + $0x48] sm:$0xff]
    %v57 = vld [vmem:[#allocation5 + $0x50] sm:$0xff]
    %v58 = vld [vmem:[#allocation5 + $0x58] sm:$0xff]
    %v59 = vld [vmem:[#allocation5 + $0x60] sm:$0xff]
    %v60 = vld [vmem:[#allocation5 + $0x68] sm:$0xff]
    %v61 = vld [vmem:[#allocation5 + $0x70] sm:$0xff]
    %v62 = vld [vmem:[#allocation5 + $0x78] sm:$0xff]
    %63 = vmatpush.msra.mxu0 %v62
    %64 = vmatpush.msra.mxu0 %v61
    %65 = vmatpush.msra.mxu0 %v60
    %66 = vmatpush.msra.mxu0 %v59
    %67 = vmatpush.msra.mxu0 %v58
    %68 = vmatpush.msra.mxu0 %v57
    %69 = vmatpush.msra.mxu0 %v56
    %70 = vmatpush.msra.mxu0 %v55
    %71 = vmatpush.msra.mxu0 %v54
    %72 = vmatpush.msra.mxu0 %v53
    %73 = vmatpush.msra.mxu0 %v52
    %74 = vmatpush.msra.mxu0 %v51
    %75 = vmatpush.msra.mxu0 %v50
    %76 = vmatpush.msra.mxu0 %v49
    %77 = vmatpush.msra.mxu0 %v48
    %78 = vmatpush.msra.mxu0 %v47
    %79 = vmatmul.f32.gmra.mxu0 %v46
    %v80 = vpop.f32.mrf.mxu0
    %v81 = vadd.f32 0.0, %v80
    %82 = vdwg.mxu0
    %v83 = vpack.c.bf16 %v81, %v81
    %84 = vst [vmem:[#allocation7] sm:$0xf] %v83
    %v85 = vrot.slane %v81, 4
    %v86 = vadd.f32 %v81, %v85
    %v87 = vrot.slane %v86, 2
    %v88 = vadd.f32 %v86, %v87
    %v89 = vrot.slane %v88, 1
    %v90 = vadd.f32 %v88, %v89
    %v91 = vmul.f32 %v81, %v81
    %v92 = vrot.slane %v91, 4
    %v93 = vadd.f32 %v91, %v92
    %v94 = vrot.slane %v93, 2
    %v95 = vadd.f32 %v93, %v94
    %v96 = vrot.slane %v95, 1
    %v97 = vadd.f32 %v95, %v96
    %98 = vst [vmem:[#allocation8] sm:$0xff] %v90
    %99 = vst [vmem:[#allocation10] sm:$0xff] %v97
    // Predicated region
    $region18: #{tpu_custom_call.1} parent=1 // pred_check
      _
    $region19: #{tpu_custom_call.1} parent=1 // pred_check_branch
      %101 = sbr.rel (0) target = $region21
    $region20: #{tpu_custom_call.1} parent=1 // pred_region
      %103 = vsyncadd [#allocation4], 0
      %s105 = sshll.u32 [#allocation7], 4
      %s106 = int_to_ptr.vmem [resolvable:$true] %s105
      %s107 = sshll.u32 %s2, 4
      %s108 = int_to_ptr.hbm [resolvable:$true] %s107
      %110 = dma.vmem_to_hbm [thread:$0]  %s106, 64, %s108, [#allocation4]
    $region21: #{tpu_custom_call.1} parent=1 // pred_fallthru
      _
    // Predicated region
    $region22: #{tpu_custom_call.1} parent=1 // pred_check
      _
    $region23: #{tpu_custom_call.1} parent=1 // pred_check_branch
      %112 = sbr.rel (0) target = $region25
    $region24: #{tpu_custom_call.1} parent=1 // pred_region
      %114 = vsyncadd [#allocation9], 0
      %s116 = sshll.u32 [#allocation8], 4
      %s117 = int_to_ptr.vmem [resolvable:$true] %s116
      %s118 = sshll.u32 %s3, 4
      %s119 = int_to_ptr.hbm [resolvable:$true] %s118
      %121 = dma.vmem_to_hbm [thread:$0]  %s117, 128, %s119, [#allocation9]
    $region25: #{tpu_custom_call.1} parent=1 // pred_fallthru
      _
    // Predicated region
    $region26: #{tpu_custom_call.1} parent=1 // pred_check
      _
    $region27: #{tpu_custom_call.1} parent=1 // pred_check_branch
      %123 = sbr.rel (0) target = $region29
    $region28: #{tpu_custom_call.1} parent=1 // pred_region
      %125 = vsyncadd [#allocation9], 0
      %s127 = sshll.u32 [#allocation10], 4
      %s128 = int_to_ptr.vmem [resolvable:$true] %s127
      %s129 = sshll.u32 %s4, 4
      %s130 = int_to_ptr.hbm [resolvable:$true] %s129
      %132 = dma.vmem_to_hbm [thread:$0]  %s128, 128, %s130, [#allocation9]
    $region29: #{tpu_custom_call.1} parent=1 // pred_fallthru
      _
    // Predicated region
    $region30: #{tpu_custom_call.1} parent=1 // pred_check
      _
    $region31: #{tpu_custom_call.1} parent=1 // pred_check_branch
      %134 = sbr.rel (0) target = $region33
    $region32: #{tpu_custom_call.1} parent=1 // pred_region
      %136 = dma.done [#allocation4], 64
    $region33: #{tpu_custom_call.1} parent=1 // pred_fallthru
      _
    // Predicated region
    $region34: #{tpu_custom_call.1} parent=1 // pred_check
      _
    $region35: #{tpu_custom_call.1} parent=1 // pred_check_branch
      %138 = sbr.rel (0) target = $region37
    $region36: #{tpu_custom_call.1} parent=1 // pred_region
      %140 = dma.done [#allocation9], 128
    $region37: #{tpu_custom_call.1} parent=1 // pred_fallthru
      _
    // Predicated region
    $region38: #{tpu_custom_call.1} parent=1 // pred_check
      _
    $region39: #{tpu_custom_call.1} parent=1 // pred_check_branch
      %142 = sbr.rel (0) target = $region41
    $region40: #{tpu_custom_call.1} parent=1 // pred_region
      %144 = dma.done [#allocation9], 128
    $region41: #{tpu_custom_call.1} parent=1 // pred_fallthru
      _
    %145 = vsyncpa [#allocation3], 1
    %146 = vsyncpa [#allocation6], 1
    %147 = vsyncpa [#allocation4], 1
    %148 = vsyncpa [#allocation9], 1

</llo_original>
